<compile_context>
chip_gen: v7x
topology: tpu7x:2x2x1
jax: 0.10.0
libtpu: 0.0.40
codegen_flags: <defaults>
</compile_context>

<pallas_src>
import jax
import jax.numpy as jnp
from jax.experimental import pallas as pl
from jax.experimental.pallas import tpu as pltpu


IN_FEATURES = 16
_PACK = 8                      # original rows packed per lane-dense row
_LANE = _PACK * IN_FEATURES    # 128 lanes


def _linear_kernel(y_ref, w_ref, b_ref, o_ref):
    # y_ref: [TM, 128] lane-dense view of 8*TM original rows (VMEM, pipelined).
    # w_ref: [128, 8] block-structured weight (VMEM-resident, fetched once).
    # b_ref: [1] f32 scalar in SMEM.
    acc = jnp.dot(y_ref[...], w_ref[...], preferred_element_type=jnp.float32)
    o_ref[...] = (acc + b_ref[0]).astype(o_ref.dtype)


def g_vector_forward(y, w, b, *, tm=8192):
    """Fused Linear(16, 1) forward.

    y: [batch, 16] float32
    w: [16, 1] (or [16]) float32   (transposed vs torch's [1, 16])
    b: [1] (or scalar) float32
    tm: batch tile in lane-dense rows (each covers 8 original rows).
    """
    batch, in_features = y.shape
    assert in_features == IN_FEATURES

    w_flat = jnp.asarray(w, jnp.float32).reshape(IN_FEATURES)
    b_arr = jnp.asarray(b, jnp.float32).reshape(1)

    # Lane-dense packing: 8 consecutive rows -> one 128-lane row.  Zero-cost
    # reshape when batch % 8 == 0 (common case); unaligned tails pad <= 7 rows.
    pad_rows = (-batch) % _PACK
    if pad_rows:
        y = jnp.pad(y, ((0, pad_rows), (0, 0)))
    rows = y.shape[0] // _PACK
    y2 = y.reshape(rows, _LANE)

    # Block-structured weight: column j carries w in rows 16j : 16j+16, so the
    # [rows,128] @ [128,8] matmul reproduces the original per-row dot product.
    w_blk = jnp.kron(jnp.eye(_PACK, dtype=jnp.float32),
                     w_flat.reshape(IN_FEATURES, 1))

    # Tile selection: as large as the VMEM budget allows, but keep >= 2 grid
    # steps when there is enough work (v7x has 2 TensorCores sharing HBM).
    tm_eff = min(tm, rows)
    if rows > 8:
        half = ((pl.cdiv(rows, 2) + 7) // 8) * 8
        tm_eff = min(tm_eff, half)
    if tm_eff != rows:
        tm_eff = max(8, (tm_eff // 8) * 8)  # (8,128) block rule
    grid = (pl.cdiv(rows, tm_eff),)         # ragged final block: no wrapper pad

    cost = pl.CostEstimate(
        flops=2 * rows * _LANE * _PACK,
        transcendentals=0,
        bytes_accessed=4 * (y2.size + w_blk.size + rows * _PACK + 1),
    )

    out2 = pl.pallas_call(
        _linear_kernel,
        out_shape=jax.ShapeDtypeStruct((rows, _PACK), jnp.float32),
        grid=grid,
        in_specs=[
            # Activations: tiled over lane-dense rows, double-buffer pipelined.
            pl.BlockSpec((tm_eff, _LANE), lambda i: (i, 0)),
            # Weight: constant block index -> DMA'd once, stays VMEM-resident.
            pl.BlockSpec((_LANE, _PACK), lambda i: (0, 0)),
            # Bias: one f32 scalar, untiled, in SMEM.
            pl.BlockSpec(memory_space=pltpu.MemorySpace.SMEM),
        ],
        out_specs=pl.BlockSpec((tm_eff, _PACK), lambda i: (i, 0)),
        compiler_params=pltpu.CompilerParams(
            dimension_semantics=("parallel",),
        ),
        cost_estimate=cost,
    )(y2, w_blk, b_arr)

    # [rows, 8] -> [rows*8, 1] -> drop tail-pad rows (if any).
    return out2.reshape(rows * _PACK, 1)[:batch]


def init_params(key, in_features=16, out_features=1):
    """Mimic PyTorch nn.Linear default init: U(-1/sqrt(fan_in), 1/sqrt(fan_in))."""
    kw, kb = jax.random.split(key)
    bound = 1.0 / jnp.sqrt(jnp.float32(in_features))
    w = jax.random.uniform(kw, (in_features, out_features), jnp.float32, -bound, bound)
    b = jax.random.uniform(kb, (out_features,), jnp.float32, -bound, bound)
    return w, b


def _reference_forward(y, w, b):
    return jnp.dot(y, w) + b


if __name__ == "__main__":
    key = jax.random.PRNGKey(0)
    key, kp, k1, k2, k3 = jax.random.split(key, 5)
    w, b = init_params(kp)

    # Small case: one lane-dense row, single grid step.
    ya = jax.random.normal(k1, (8, IN_FEATURES), jnp.float32)
    oa = jax.block_until_ready(g_vector_forward(ya, w, b))
    ra = _reference_forward(ya, w, b)
    assert oa.shape == (8, 1)
    assert jnp.allclose(oa, ra, atol=1e-5, rtol=1e-5)

    # Batch not divisible by 8: exercises the small tail-pad path.
    yb = jax.random.normal(k2, (37, IN_FEATURES), jnp.float32)
    ob = jax.block_until_ready(g_vector_forward(yb, w, b))
    rb = _reference_forward(yb, w, b)
    assert ob.shape == (37, 1)
    assert jnp.allclose(ob, rb, atol=1e-5, rtol=1e-5)

    # Larger batch: 125 lane-dense rows -> 2 grid steps with a ragged last block.
    yc = jax.random.normal(k3, (1000, IN_FEATURES), jnp.float32)
    oc = jax.block_until_ready(g_vector_forward(yc, w, b))
    rc = _reference_forward(yc, w, b)
    assert oc.shape == (1000, 1)
    assert jnp.allclose(oc, rc, atol=1e-5, rtol=1e-5)

    print("KERNEL_OK")
</pallas_src>

<mosaic_0001>
module attributes {stable_mosaic.version = 11 : i64} {
  func.func @_linear_kernel(%arg0: i32, %arg1: memref<1x128xf32, #tpu.memory_space<vmem>>, %arg2: memref<128x8xf32, #tpu.memory_space<vmem>>, %arg3: memref<1xf32, #tpu.memory_space<smem>>, %arg4: memref<1x8xf32, #tpu.memory_space<vmem>>) attributes {dimension_semantics = [#tpu.dimension_semantics<parallel>], iteration_bounds = array<i64: 1>, scalar_prefetch = 0 : i64, scratch_operands = 0 : i64, tpu.core_type = #tpu.core_type<tc>, window_params = [{transform_indices = @transform_0, window_bounds = array<i64: 1, 128>}, {pipeline_mode = #tpu.pipeline_mode<synchronous>, transform_indices = @transform_1, window_bounds = array<i64: 128, 8>}, {transform_indices = @transform_2, window_bounds = array<i64: 1>}, {transform_indices = @transform_3, window_bounds = array<i64: 1, 8>}]} {
    %c0 = arith.constant 0 : index
    %c0_0 = arith.constant 0 : index
    %0 = vector.load %arg1[%c0, %c0_0] : memref<1x128xf32, #tpu.memory_space<vmem>>, vector<1x128xf32>
    %c0_1 = arith.constant 0 : index
    %c0_2 = arith.constant 0 : index
    %1 = vector.load %arg2[%c0_1, %c0_2] : memref<128x8xf32, #tpu.memory_space<vmem>>, vector<128x8xf32>
    %cst = arith.constant dense<0.000000e+00> : vector<1x8xf32>
    %2 = tpu.matmul %0, %1, %cst {dimension_numbers = #tpu.dot_dimension_numbers<[1], [0], [0], [1], [0, 0, 1, 1], [], []>} : vector<1x128xf32>, vector<128x8xf32>, vector<1x8xf32> -> vector<1x8xf32>
    %c0_3 = arith.constant 0 : index
    %3 = memref.load %arg3[%c0_3] : memref<1xf32, #tpu.memory_space<smem>>
    %4 = vector.broadcast %3 : f32 to vector<1x8xf32>
    %5 = arith.addf %2, %4 : vector<1x8xf32>
    %c0_4 = arith.constant 0 : index
    %c0_5 = arith.constant 0 : index
    %6 = vector.load %arg4[%c0_4, %c0_5] : memref<1x8xf32, #tpu.memory_space<vmem>>, vector<1x8xf32>
    tpu.vector_store %arg4[%c0_4, %c0_5], %5 {strides = array<i32>} : memref<1x8xf32, #tpu.memory_space<vmem>>, vector<1x8xf32>,
    return
  }
  func.func @transform_0(%arg0: i32) -> (i32, i32) {
    %c0_i32 = arith.constant 0 : i32
    %c0_i32_0 = arith.constant 0 : i32
    return %arg0, %c0_i32 : i32, i32
  }
  func.func @transform_1(%arg0: i32) -> (i32, i32) {
    %c0_i32 = arith.constant 0 : i32
    %c0_i32_0 = arith.constant 0 : i32
    %c0_i32_1 = arith.constant 0 : i32
    return %c0_i32, %c0_i32_0 : i32, i32
  }
  func.func @transform_2(%arg0: i32) -> i32 {
    %c0_i32 = arith.constant 0 : i32
    %c0_i32_0 = arith.constant 0 : i32
    return %c0_i32 : i32
  }
  func.func @transform_3(%arg0: i32) -> (i32, i32) {
    %c0_i32 = arith.constant 0 : i32
    %c0_i32_0 = arith.constant 0 : i32
    return %arg0, %c0_i32 : i32, i32
  }
}

</mosaic_0001>

<llo_original>
// kernel: tpu_custom_call.1
$region0: #{tpu_custom_call.1}
  #allocation0 [shape = 'u32[]', space=smem, size = 0x4, offset = 0x4, fixed_abs, tag = 'smem constant byte address 0x4 - core index']
  #allocation1 [shape = 'u32[144,128]{1,0:T(1,128)}', space=vmem, size = 0x12000, scoped, tag = 'internal scratch']
  #allocation2 [shape = 'f32[1]{0:T(128)S(6)}', space=smem, size = 0x200, scoped, tag = 'scoped memory for tpu_custom_call.1']
  %s0 = inlined_call_operand.vmem [shape: f32[1,128], index: 0, kind: input, shape index: {}]
  %s1 = inlined_call_operand.vmem [shape: f32[128,8], index: 1, kind: input, shape index: {}]
  %s2 = inlined_call_operand.<no memory space> [shape: f32[1], index: 2, kind: input, shape index: {}]
  %s3 = inlined_call_operand.hbm [shape: f32[1,8], index: 3, kind: output, shape index: {}]
  %s4 = sld [smem:[#allocation0]]
  $region22: #{tpu_custom_call.1} parent=0
    _
  %s6 = ssub.s32 1, %s4
  %s7 = scalar_select 0, %s6, %s4
  %8 = sst [smem:[#allocation2]] %s2
  $region1: #{tpu_custom_call.1} parent=0
    #allocation3 [shape = 'u8[512]{0}', space=vmem, size = 0x400, scoped, tag = 'output window, operand 0, single buffered']
    #allocation4 [shape = 's32[1]{0}', space=sflag, size = 0x4, scoped, tag = 'scoped memory for tpu_custom_call.1']
    %9 = vsyncpa [#allocation4], 0
    // Predicated region
    $region2: #{tpu_custom_call.1} parent=1 // pred_check
      _
    $region3: #{tpu_custom_call.1} parent=1 // pred_check_branch
      %11 = sbr.rel (0) target = $region5
    $region4: #{tpu_custom_call.1} parent=1 // pred_region
      _
    $region5: #{tpu_custom_call.1} parent=1 // pred_fallthru
      _
    // Predicated region
    $region6: #{tpu_custom_call.1} parent=1 // pred_check
      _
    $region7: #{tpu_custom_call.1} parent=1 // pred_check_branch
      %13 = sbr.rel (0) target = $region9
    $region8: #{tpu_custom_call.1} parent=1 // pred_region
      _
    $region9: #{tpu_custom_call.1} parent=1 // pred_fallthru
      _
    // Predicated region
    $region10: #{tpu_custom_call.1} parent=1 // pred_check
      _
    $region11: #{tpu_custom_call.1} parent=1 // pred_check_branch
      %15 = sbr.rel (0) target = $region13
    $region12: #{tpu_custom_call.1} parent=1 // pred_region
      _
    $region13: #{tpu_custom_call.1} parent=1 // pred_fallthru
      _
    %v16 = vld [vmem:[%s0] sm:$0x1]
    %v17 = vld [vmem:[%s1] sm:$0xff]
    %v18 = vld [vmem:[%s1 + $0x8] sm:$0xff]
    %v19 = vld [vmem:[%s1 + $0x10] sm:$0xff]
    %v20 = vld [vmem:[%s1 + $0x18] sm:$0xff]
    %v21 = vld [vmem:[%s1 + $0x20] sm:$0xff]
    %v22 = vld [vmem:[%s1 + $0x28] sm:$0xff]
    %v23 = vld [vmem:[%s1 + $0x30] sm:$0xff]
    %v24 = vld [vmem:[%s1 + $0x38] sm:$0xff]
    %v25 = vld [vmem:[%s1 + $0x40] sm:$0xff]
    %v26 = vld [vmem:[%s1 + $0x48] sm:$0xff]
    %v27 = vld [vmem:[%s1 + $0x50] sm:$0xff]
    %v28 = vld [vmem:[%s1 + $0x58] sm:$0xff]
    %v29 = vld [vmem:[%s1 + $0x60] sm:$0xff]
    %v30 = vld [vmem:[%s1 + $0x68] sm:$0xff]
    %v31 = vld [vmem:[%s1 + $0x70] sm:$0xff]
    %v32 = vld [vmem:[%s1 + $0x78] sm:$0xff]
    %s33 = sld [smem:[#allocation2]]
    %v34 = vstv %s33
    %35 = vmatprep.subr.mxu0 0.0
    %36 = vmatpush1.msra.mxu0 %v17
    %37 = vmatprep.subr.mxu0 0.0
    %38 = vmatpush1.msra.mxu0 %v18
    %39 = vmatprep.subr.mxu0 0.0
    %40 = vmatpush1.msra.mxu0 %v19
    %41 = vmatprep.subr.mxu0 0.0
    %42 = vmatpush1.msra.mxu0 %v20
    %43 = vmatprep.subr.mxu0 0.0
    %44 = vmatpush1.msra.mxu0 %v21
    %45 = vmatprep.subr.mxu0 0.0
    %46 = vmatpush1.msra.mxu0 %v22
    %47 = vmatprep.subr.mxu0 0.0
    %48 = vmatpush1.msra.mxu0 %v23
    %49 = vmatprep.subr.mxu0 0.0
    %50 = vmatpush1.msra.mxu0 %v24
    %51 = vmatprep.subr.mxu0 0.0
    %52 = vmatpush1.msra.mxu0 %v25
    %53 = vmatprep.subr.mxu0 0.0
    %54 = vmatpush1.msra.mxu0 %v26
    %55 = vmatprep.subr.mxu0 0.0
    %56 = vmatpush1.msra.mxu0 %v27
    %57 = vmatprep.subr.mxu0 0.0
    %58 = vmatpush1.msra.mxu0 %v28
    %59 = vmatprep.subr.mxu0 0.0
    %60 = vmatpush1.msra.mxu0 %v29
    %61 = vmatprep.subr.mxu0 0.0
    %62 = vmatpush1.msra.mxu0 %v30
    %63 = vmatprep.subr.mxu0 0.0
    %64 = vmatpush1.msra.mxu0 %v31
    %65 = vmatprep.subr.mxu0 0.0
    %66 = vmatpush1.msra.mxu0 %v32
    %67 = vmatprep.subr.mxu0 0.0
    %68 = vmatpush1.msra.mxu0 0.0
    %69 = vmatprep.subr.mxu0 0.0
    %70 = vmatpush1.msra.mxu0 0.0
    %71 = vmatprep.subr.mxu0 0.0
    %72 = vmatpush1.msra.mxu0 0.0
    %73 = vmatprep.subr.mxu0 0.0
    %74 = vmatpush1.msra.mxu0 0.0
    %75 = vmatprep.subr.mxu0 0.0
    %76 = vmatpush1.msra.mxu0 0.0
    %77 = vmatprep.subr.mxu0 0.0
    %78 = vmatpush1.msra.mxu0 0.0
    %79 = vmatprep.subr.mxu0 0.0
    %80 = vmatpush1.msra.mxu0 0.0
    %81 = vmatprep.subr.mxu0 0.0
    %82 = vmatpush1.msra.mxu0 0.0
    %83 = vmatprep.subr.mxu0 0.0
    %84 = vmatpush1.msra.mxu0 0.0
    %85 = vmatprep.subr.mxu0 0.0
    %86 = vmatpush1.msra.mxu0 0.0
    %87 = vmatprep.subr.mxu0 0.0
    %88 = vmatpush1.msra.mxu0 0.0
    %89 = vmatprep.subr.mxu0 0.0
    %90 = vmatpush1.msra.mxu0 0.0
    %91 = vmatprep.subr.mxu0 0.0
    %92 = vmatpush1.msra.mxu0 0.0
    %93 = vmatprep.subr.mxu0 0.0
    %94 = vmatpush1.msra.mxu0 0.0
    %95 = vmatprep.subr.mxu0 0.0
    %96 = vmatpush1.msra.mxu0 0.0
    %97 = vmatprep.subr.mxu0 0.0
    %98 = vmatpush1.msra.mxu0 0.0
    %99 = vmatprep.mubr.f32.mxu0 0.0
    %100 = vmatmul.mubr.f32.gmra.mrb[0].mxu0 %v16
    %v101 = vpop.f32.mrb[0].mxu0
    %v102 = vadd.f32 %v34, %v101
    %v103 = vpop.f32.mrb[0].mxu0
    %104 = vdwg.mxu0
    %vm105 = vcmask 57344
    %106 = vst.msk [vmem:[#allocation3] sm:$0x1] %vm105, %v102
    // Predicated region
    $region14: #{tpu_custom_call.1} parent=1 // pred_check
      _
    $region15: #{tpu_custom_call.1} parent=1 // pred_check_branch
      %108 = sbr.rel (0) target = $region17
    $region16: #{tpu_custom_call.1} parent=1 // pred_region
      %s110 = ssub.s32 16, 16
      %111 = vsyncadd [#allocation4], %s110
      %s113 = sshll.u32 [#allocation3], 4
      %s114 = int_to_ptr.vmem [resolvable:$true] %s113
      %116 = dma.vmem_to_hbm [thread:$0]  %s114, 16, %s3, [#allocation4]
    $region17: #{tpu_custom_call.1} parent=1 // pred_fallthru
      _
    // Predicated region
    $region18: #{tpu_custom_call.1} parent=1 // pred_check
      _
    $region19: #{tpu_custom_call.1} parent=1 // pred_check_branch
      %118 = sbr.rel (0) target = $region21
    $region20: #{tpu_custom_call.1} parent=1 // pred_region
      %119 = dma.done [#allocation4], 16
    $region21: #{tpu_custom_call.1} parent=1 // pred_fallthru
      _
    %120 = vsyncpa [#allocation4], 1

</llo_original>
